<compile_context>
chip_gen: v5e
topology: v5e:2x2
jax: 0.10.0
libtpu: 0.0.40
codegen_flags: <defaults>
</compile_context>

<pallas_src>
import jax
import jax.numpy as jnp
from jax.experimental import pallas as pl
from jax.experimental.pallas import tpu as pltpu

EPS = 1e-5


def _round_up(a, m):
    return (a + m - 1) // m * m


def _vmem_capacity_bytes():
    """Physical per-core VMEM; conservative v7x default if the query fails."""
    try:
        return int(pltpu.get_tpu_info().vmem_capacity_bytes)
    except Exception:
        return 64 * 1024 * 1024


def _elementwise_dtype():
    """bf16 elementwise on v6e/v7x (bf16-native VPU); f32 on older chips."""
    try:
        kind = jax.devices()[0].device_kind.lower()
    except Exception:
        kind = ""
    if any(t in kind for t in ("v2", "v3", "v4", "v5 lite", "v5lite", "v5e")):
        return jnp.float32
    return jnp.bfloat16


def _make_kernel(ew_dtype):
    def kernel(x_ref, scale_ref, shift_ref, w_ref, o_ref):
        # x_ref:     (1, 4, TP, Cin)   bf16   (4 = 2x2 pool-window positions)
        # scale_ref: (1, Cin)          ew     (= gamma * rsqrt(var + eps))
        # shift_ref: (1, Cin)          ew     (= beta  - mean * scale)
        # w_ref:     (Cin, TCout)      bf16   (1x1 conv weight, 1/4 folded in)
        # o_ref:     (1, TP, TCout)    bf16
        scale = scale_ref[...]
        shift = shift_ref[...]
        # Unrolled pool accumulation: live temporaries stay ~ (TP, Cin).
        acc = None
        for k in range(4):
            xk = x_ref[0, k].astype(ew_dtype)
            yk = jnp.maximum(xk * scale + shift, 0)
            acc = yk if acc is None else acc + yk
        # 1x1 conv == channel matmul on the MXU, f32 accumulation.
        out = jnp.dot(acc.astype(jnp.bfloat16), w_ref[...],
                      preferred_element_type=jnp.float32)
        o_ref[0] = out.astype(o_ref.dtype)
    return kernel


def _choose_tp(P, cin_pad, cout_tile, ew_bytes, budget_bytes):
    """Smallest split count k -> TP = round_up(ceil(P/k), 8), so p_pad ~= P."""
    def footprint(tp):
        x_blk = 4 * tp * cin_pad * 2            # bf16 input block
        o_blk = tp * cout_tile * 2              # bf16 output block
        w_blk = cin_pad * cout_tile * 2         # bf16 weights
        temps = 2 * tp * cin_pad * ew_bytes + tp * cout_tile * 4
        return 2 * (x_blk + o_blk + w_blk) + temps   # double-buffered blocks
    k = 1
    while True:
        tp = _round_up(max(1, (P + k - 1) // k), 8)
        if footprint(tp) <= budget_bytes or tp <= 8:
            return tp
        k += 1


def transition_forward(x_nchw, gamma, beta, conv_weight):
    """x_nchw: (N, Cin, H, W) f32.  conv_weight: (Cout, Cin, 1, 1) f32.
    Returns (N, Cout, H//2, W//2) f32 (module boundary)."""
    N, Cin, H, W = x_nchw.shape
    Cout = conv_weight.shape[0]
    assert H % 2 == 0 and W % 2 == 0
    Hp, Wp = H // 2, W // 2
    P = Hp * Wp

    ew_dtype = _elementwise_dtype()
    ew_bytes = jnp.dtype(ew_dtype).itemsize

    # ---- single fused relayout pass: NCHW f32 -> (N, 4, P, Cin) bf16 -------
    x = jnp.transpose(x_nchw, (0, 2, 3, 1))              # NHWC
    x = x.reshape(N, Hp, 2, Wp, 2, Cin)
    x = jnp.transpose(x, (0, 2, 4, 1, 3, 5))             # (N,2,2,Hp,Wp,C)
    x4 = x.reshape(N, 4, P, Cin).astype(jnp.bfloat16)

    # ---- training-mode BN batch statistics (biased variance) ---------------
    # Computed from the same bf16 tensor the kernel normalizes (consistent),
    # centered two-pass variance (no E[x^2]-E[x]^2 cancellation).  Two bf16
    # reads ~= one f32 pass of HBM traffic.
    n_elem = N * H * W
    mean = jnp.sum(x4.astype(jnp.float32), axis=(0, 1, 2)) / n_elem
    var = jnp.sum(jnp.square(x4.astype(jnp.float32) - mean),
                  axis=(0, 1, 2)) / n_elem
    scale = gamma.astype(jnp.float32) * jax.lax.rsqrt(var + EPS)
    shift = beta.astype(jnp.float32) - mean * scale

    # ---- lane-dense channel padding & generation-aware tile selection ------
    cin_pad = _round_up(Cin, 128)
    cout_pad = _round_up(Cout, 128)

    cap = _vmem_capacity_bytes()
    vmem_limit = min(cap * 5 // 8, 64 * 1024 * 1024)   # ~40 MiB v7x, 64 MiB v5e/v6e
    block_budget = vmem_limit * 2 // 3

    cout_tile, grid_c = cout_pad, 1
    tp = _choose_tp(P, cin_pad, cout_tile, ew_bytes, block_budget)
    p_pad = _round_up(P, tp)
    grid_p = p_pad // tp
    # v7x has 2 TensorCores: guarantee >= 2 parallel steps for tiny N / small
    # feature maps by splitting the output channels (no-op on v5e/v6e).
    if N * grid_p < 2 and cout_pad % 256 == 0:
        cout_tile, grid_c = cout_pad // 2, 2

    x4 = jnp.pad(x4, ((0, 0), (0, 0), (0, p_pad - P), (0, cin_pad - Cin)))

    # conv weight (Cout, Cin, 1, 1) -> (Cin_pad, Cout_pad) bf16, 1/4 folded in
    w = (0.25 * conv_weight[:, :, 0, 0].astype(jnp.float32)).T   # (Cin, Cout)
    w = jnp.pad(w, ((0, cin_pad - Cin), (0, cout_pad - Cout))).astype(
        jnp.bfloat16)

    sc = jnp.pad(scale, (0, cin_pad - Cin)).reshape(1, cin_pad).astype(ew_dtype)
    sh = jnp.pad(shift, (0, cin_pad - Cin)).reshape(1, cin_pad).astype(ew_dtype)

    cost = pl.CostEstimate(
        flops=(2 * N * p_pad * cin_pad * cout_pad
               + 3 * N * 4 * p_pad * cin_pad          # BN mul/add + relu
               + 3 * N * p_pad * cin_pad),            # pool accumulation
        transcendentals=0,
        bytes_accessed=(N * 4 * p_pad * cin_pad * 2   # bf16 activations in
                        + N * p_pad * cout_pad * 2    # bf16 output
                        + cin_pad * cout_pad * 2      # bf16 weights
                        + 2 * cin_pad * ew_bytes))    # scale / shift

    out = pl.pallas_call(
        _make_kernel(ew_dtype),
        out_shape=jax.ShapeDtypeStruct((N, p_pad, cout_pad), jnp.bfloat16),
        grid_spec=pltpu.PrefetchScalarGridSpec(
            num_scalar_prefetch=0,
            grid=(N, grid_p, grid_c),
            in_specs=[
                pl.BlockSpec((1, 4, tp, cin_pad), lambda n, p, c: (n, 0, p, 0)),
                # TODO(synk): scale/shift/w are grid-invariant; single-buffer
                # them (pipeline_mode=pl.Buffered(1)) once that path is stable.
                pl.BlockSpec((1, cin_pad), lambda n, p, c: (0, 0)),
                pl.BlockSpec((1, cin_pad), lambda n, p, c: (0, 0)),
                pl.BlockSpec((cin_pad, cout_tile), lambda n, p, c: (0, c)),
            ],
            out_specs=pl.BlockSpec((1, tp, cout_tile),
                                   lambda n, p, c: (n, p, c)),
        ),
        compiler_params=pltpu.CompilerParams(
            dimension_semantics=("parallel", "parallel", "parallel"),
            vmem_limit_bytes=vmem_limit),
        cost_estimate=cost,
    )(x4, sc, sh, w)

    # ---- back to the module's NCHW / f32 boundary ---------------------------
    # TODO(synk): chained DenseNet blocks should stay channels-last bf16 and
    # skip this transpose; it is only the module-boundary conversion here.
    out = out[:, :P, :Cout].astype(jnp.float32)
    out = out.reshape(N, Hp, Wp, Cout)
    return jnp.transpose(out, (0, 3, 1, 2))


def _reference(x_nchw, gamma, beta, conv_weight):
    """Pure-JAX f32 reference of the PyTorch forward (training-mode BN)."""
    mean = jnp.mean(x_nchw, axis=(0, 2, 3))
    var = jnp.mean((x_nchw - mean[None, :, None, None]) ** 2, axis=(0, 2, 3))
    y = (x_nchw - mean[None, :, None, None]) * jax.lax.rsqrt(
        var + EPS)[None, :, None, None]
    y = y * gamma[None, :, None, None] + beta[None, :, None, None]
    y = jnp.maximum(y, 0.0)
    w = conv_weight[:, :, 0, 0]                                  # (Cout, Cin)
    z = jnp.einsum('nchw,oc->nohw', y, w)
    N, Co, H, W = z.shape
    z = z.reshape(N, Co, H // 2, 2, W // 2, 2).mean(axis=(3, 5))
    return z


if __name__ == "__main__":
    key = jax.random.PRNGKey(0)
    k_x, k_g, k_b, k_w = jax.random.split(key, 4)

    N, Cin, H, W = 2, 8, 16, 16
    Cout = 4  # DenseNet transitions compress channels

    x = jax.random.normal(k_x, (N, Cin, H, W), dtype=jnp.float32)
    gamma = 1.0 + 0.1 * jax.random.normal(k_g, (Cin,), dtype=jnp.float32)
    beta = 0.1 * jax.random.normal(k_b, (Cin,), dtype=jnp.float32)
    conv_weight = 0.2 * jax.random.normal(k_w, (Cout, Cin, 1, 1),
                                          dtype=jnp.float32)

    fwd = jax.jit(transition_forward)
    out = jax.block_until_ready(fwd(x, gamma, beta, conv_weight))

    ref = _reference(x, gamma, beta, conv_weight)
    assert out.shape == (N, Cout, H // 2, W // 2), out.shape
    # End-to-end bf16 storage/elementwise (f32 MXU accumulation) and bf16
    # batch statistics -> widened tolerance vs the pure-f32 reference.
    max_err = float(jnp.max(jnp.abs(out - ref)))
    assert jnp.allclose(out, ref, atol=5e-2, rtol=5e-2), max_err

    print("KERNEL_OK")
</pallas_src>

<mosaic_0001>
module attributes {stable_mosaic.version = 11 : i64} {
  func.func @kernel(%arg0: i32, %arg1: i32, %arg2: i32, %arg3: memref<1x4x64x128xbf16, #tpu.memory_space<vmem>>, %arg4: memref<1x128xbf16, #tpu.memory_space<vmem>>, %arg5: memref<1x128xbf16, #tpu.memory_space<vmem>>, %arg6: memref<128x128xbf16, #tpu.memory_space<vmem>>, %arg7: memref<1x64x128xbf16, #tpu.memory_space<vmem>>) attributes {dimension_semantics = [#tpu.dimension_semantics<parallel>, #tpu.dimension_semantics<parallel>, #tpu.dimension_semantics<parallel>], iteration_bounds = array<i64: 2, 1, 1>, scalar_prefetch = 0 : i64, scratch_operands = 0 : i64, tpu.core_type = #tpu.core_type<tc>, window_params = [{transform_indices = @transform_0, window_bounds = array<i64: 1, 4, 64, 128>}, {pipeline_mode = #tpu.pipeline_mode<synchronous>, transform_indices = @transform_1, window_bounds = array<i64: 1, 128>}, {pipeline_mode = #tpu.pipeline_mode<synchronous>, transform_indices = @transform_2, window_bounds = array<i64: 1, 128>}, {transform_indices = @transform_3, window_bounds = array<i64: 128, 128>}, {transform_indices = @transform_4, window_bounds = array<i64: 1, 64, 128>}]} {
    %c0 = arith.constant 0 : index
    %c0_0 = arith.constant 0 : index
    %0 = vector.load %arg4[%c0, %c0_0] : memref<1x128xbf16, #tpu.memory_space<vmem>>, vector<1x128xbf16>
    %c0_1 = arith.constant 0 : index
    %c0_2 = arith.constant 0 : index
    %1 = vector.load %arg5[%c0_1, %c0_2] : memref<1x128xbf16, #tpu.memory_space<vmem>>, vector<1x128xbf16>
    %c0_3 = arith.constant 0 : index
    %c0_4 = arith.constant 0 : index
    %c0_5 = arith.constant 0 : index
    %c0_6 = arith.constant 0 : index
    %2 = vector.load %arg3[%c0_3, %c0_4, %c0_5, %c0_6] : memref<1x4x64x128xbf16, #tpu.memory_space<vmem>>, vector<1x1x64x128xbf16>
    %3 = vector.shape_cast %2 : vector<1x1x64x128xbf16> to vector<64x128xbf16>
    %4 = vector.broadcast %0 : vector<1x128xbf16> to vector<64x128xbf16>
    %5 = arith.mulf %3, %4 : vector<64x128xbf16>
    %6 = vector.broadcast %1 : vector<1x128xbf16> to vector<64x128xbf16>
    %7 = arith.addf %5, %6 : vector<64x128xbf16>
    %cst = arith.constant 0.000000e+00 : bf16
    %8 = vector.broadcast %cst : bf16 to vector<64x128xbf16>
    %9 = arith.maximumf %7, %8 : vector<64x128xbf16>
    %c0_7 = arith.constant 0 : index
    %c1 = arith.constant 1 : index
    %c0_8 = arith.constant 0 : index
    %c0_9 = arith.constant 0 : index
    %10 = vector.load %arg3[%c0_7, %c1, %c0_8, %c0_9] : memref<1x4x64x128xbf16, #tpu.memory_space<vmem>>, vector<1x1x64x128xbf16>
    %11 = vector.shape_cast %10 : vector<1x1x64x128xbf16> to vector<64x128xbf16>
    %12 = vector.broadcast %0 : vector<1x128xbf16> to vector<64x128xbf16>
    %13 = arith.mulf %11, %12 : vector<64x128xbf16>
    %14 = vector.broadcast %1 : vector<1x128xbf16> to vector<64x128xbf16>
    %15 = arith.addf %13, %14 : vector<64x128xbf16>
    %cst_10 = arith.constant 0.000000e+00 : bf16
    %16 = vector.broadcast %cst_10 : bf16 to vector<64x128xbf16>
    %17 = arith.maximumf %15, %16 : vector<64x128xbf16>
    %18 = arith.addf %9, %17 : vector<64x128xbf16>
    %c0_11 = arith.constant 0 : index
    %c2 = arith.constant 2 : index
    %c0_12 = arith.constant 0 : index
    %c0_13 = arith.constant 0 : index
    %19 = vector.load %arg3[%c0_11, %c2, %c0_12, %c0_13] : memref<1x4x64x128xbf16, #tpu.memory_space<vmem>>, vector<1x1x64x128xbf16>
    %20 = vector.shape_cast %19 : vector<1x1x64x128xbf16> to vector<64x128xbf16>
    %21 = vector.broadcast %0 : vector<1x128xbf16> to vector<64x128xbf16>
    %22 = arith.mulf %20, %21 : vector<64x128xbf16>
    %23 = vector.broadcast %1 : vector<1x128xbf16> to vector<64x128xbf16>
    %24 = arith.addf %22, %23 : vector<64x128xbf16>
    %cst_14 = arith.constant 0.000000e+00 : bf16
    %25 = vector.broadcast %cst_14 : bf16 to vector<64x128xbf16>
    %26 = arith.maximumf %24, %25 : vector<64x128xbf16>
    %27 = arith.addf %18, %26 : vector<64x128xbf16>
    %c0_15 = arith.constant 0 : index
    %c3 = arith.constant 3 : index
    %c0_16 = arith.constant 0 : index
    %c0_17 = arith.constant 0 : index
    %28 = vector.load %arg3[%c0_15, %c3, %c0_16, %c0_17] : memref<1x4x64x128xbf16, #tpu.memory_space<vmem>>, vector<1x1x64x128xbf16>
    %29 = vector.shape_cast %28 : vector<1x1x64x128xbf16> to vector<64x128xbf16>
    %30 = vector.broadcast %0 : vector<1x128xbf16> to vector<64x128xbf16>
    %31 = arith.mulf %29, %30 : vector<64x128xbf16>
    %32 = vector.broadcast %1 : vector<1x128xbf16> to vector<64x128xbf16>
    %33 = arith.addf %31, %32 : vector<64x128xbf16>
    %cst_18 = arith.constant 0.000000e+00 : bf16
    %34 = vector.broadcast %cst_18 : bf16 to vector<64x128xbf16>
    %35 = arith.maximumf %33, %34 : vector<64x128xbf16>
    %36 = arith.addf %27, %35 : vector<64x128xbf16>
    %c0_19 = arith.constant 0 : index
    %c0_20 = arith.constant 0 : index
    %37 = vector.load %arg6[%c0_19, %c0_20] : memref<128x128xbf16, #tpu.memory_space<vmem>>, vector<128x128xbf16>
    %cst_21 = arith.constant dense<0.000000e+00> : vector<64x128xf32>
    %38 = tpu.matmul %36, %37, %cst_21 {dimension_numbers = #tpu.dot_dimension_numbers<[1], [0], [0], [1], [0, 0, 1, 1], [], []>} : vector<64x128xbf16>, vector<128x128xbf16>, vector<64x128xf32> -> vector<64x128xf32>
    %39 = arith.truncf %38 : vector<64x128xf32> to vector<64x128xbf16>
    %c0_22 = arith.constant 0 : index
    %c0_23 = arith.constant 0 : index
    %c0_24 = arith.constant 0 : index
    %40 = vector.load %arg7[%c0_22, %c0_23, %c0_24] : memref<1x64x128xbf16, #tpu.memory_space<vmem>>, vector<1x64x128xbf16>
    %41 = vector.shape_cast %40 : vector<1x64x128xbf16> to vector<64x128xbf16>
    %42 = vector.shape_cast %39 : vector<64x128xbf16> to vector<1x64x128xbf16>
    tpu.vector_store %arg7[%c0_22, %c0_23, %c0_24], %42 {strides = array<i32>} : memref<1x64x128xbf16, #tpu.memory_space<vmem>>, vector<1x64x128xbf16>,
    return
  }
  func.func @transform_0(%arg0: i32, %arg1: i32, %arg2: i32) -> (i32, i32, i32, i32) {
    %c0_i32 = arith.constant 0 : i32
    %c0_i32_0 = arith.constant 0 : i32
    %c0_i32_1 = arith.constant 0 : i32
    return %arg0, %c0_i32, %arg1, %c0_i32_0 : i32, i32, i32, i32
  }
  func.func @transform_1(%arg0: i32, %arg1: i32, %arg2: i32) -> (i32, i32) {
    %c0_i32 = arith.constant 0 : i32
    %c0_i32_0 = arith.constant 0 : i32
    %c0_i32_1 = arith.constant 0 : i32
    return %c0_i32, %c0_i32_0 : i32, i32
  }
  func.func @transform_2(%arg0: i32, %arg1: i32, %arg2: i32) -> (i32, i32) {
    %c0_i32 = arith.constant 0 : i32
    %c0_i32_0 = arith.constant 0 : i32
    %c0_i32_1 = arith.constant 0 : i32
    return %c0_i32, %c0_i32_0 : i32, i32
  }
  func.func @transform_3(%arg0: i32, %arg1: i32, %arg2: i32) -> (i32, i32) {
    %c0_i32 = arith.constant 0 : i32
    %c0_i32_0 = arith.constant 0 : i32
    return %c0_i32, %arg2 : i32, i32
  }
  func.func @transform_4(%arg0: i32, %arg1: i32, %arg2: i32) -> (i32, i32, i32) {
    %c0_i32 = arith.constant 0 : i32
    return %arg0, %arg1, %arg2 : i32, i32, i32
  }
}

</mosaic_0001>

<llo_original>
// kernel: transition_forward.1
$region0: #{transition_forward.1}
  #allocation0 [shape = 'u32[]', space=smem, size = 0x4, offset = 0x4, fixed_abs, tag = 'smem constant byte address 0x4 - core index']
  #allocation1 [shape = 'u32[72,128]{1,0:T(1,128)}', space=vmem, size = 0x9000, scoped, tag = 'internal scratch']
  %s0 = inlined_call_operand.vmem [shape: bf16[2,4,64,128], index: 0, kind: input, shape index: {}]
  %s1 = inlined_call_operand.vmem [shape: bf16[1,128], index: 1, kind: input, shape index: {}]
  %s2 = inlined_call_operand.vmem [shape: bf16[1,128], index: 2, kind: input, shape index: {}]
  %s3 = inlined_call_operand.vmem [shape: bf16[128,128], index: 3, kind: input, shape index: {}]
  %s4 = inlined_call_operand.vmem [shape: bf16[2,64,128], index: 4, kind: output, shape index: {}]
  %s5 = sld [smem:[#allocation0]]
  $region49: #{transition_forward.1} parent=0
    _
  %s7 = ssub.s32 1, %s5
  %s8 = scalar_select 0, %s7, %s5
  loop: start=0, step=1, limit=4
  $region2: #{transition_forward.1} parent=0 // loop_pre_header
    _
  $region3: #{transition_forward.1} parent=0 // loop_header
    %s10 = sphi 0, %s14
    %p11 = scmp.ge.s32.totalorder %s10, 4
    %s17 = sphi 0, %s36
    %s18 = sphi 0, %s32
    %s19 = sphi 0, %s28
    %s20 = sphi 0, %s17
    %s21 = sphi 0, %s18
    %s22 = sphi 0, %s19
    %s23 = sphi 0, %s20
    %s24 = sphi 0, %s21
    %s25 = sphi 0, %s22
    %s41 = sphi 0, %s43
    %s44 = sphi 0, %s41
    %s45 = sphi 0, %s44
    %s61 = sphi 0, %s45
    %s65 = sphi 0, %s65
    %s67 = sphi 0, %s65
    %s68 = sphi 0, %s67
    %s82 = sphi 0, %s68
    %s86 = sphi 0, %s86
    %s88 = sphi 0, %s86
    %s89 = sphi 0, %s88
    %s103 = sphi 0, %s89
    %s109 = sphi 0, %s111
    %s112 = sphi 0, %s109
    %s113 = sphi 0, %s112
    %s129 = sphi 0, %s113
    %s139 = sphi 0, %s141
    %s142 = sphi 0, %s139
    %s143 = sphi 0, %s142
    %s159 = sphi 0, %s143
  $region4: #{transition_forward.1} parent=0 // loop_header_branch
    %13 = sbr.rel (%p11) target = $region8
  $region5: #{transition_forward.1} parent=0 // loop_body
    %s15 = ssub.s32 %s10, 1
    %s16 = ssub.s32 %s10, 2
    %s26 = sadd.s32 1, %s19
    %p27 = scmp.ge.s32.totalorder %s26, 1
    %s28 = scalar_select %p27, 0, %s26
    %s29 = sadd.s32 1, %s18
    %s30 = scalar_select %p27, %s29, %s18
    %p31 = scmp.ge.s32.totalorder %s30, 1
    %s32 = scalar_select %p31, 0, %s30
    %s33 = sadd.s32 1, %s17
    %s34 = scalar_select %p31, %s33, %s17
    %p35 = scmp.ge.s32.totalorder %s34, 2
    %s36 = scalar_select %p35, 0, %s34
    %s37 = ssub.s32 %s17, %s36
    %s38 = ssub.s32 %s18, %s32
    %s39 = sor.u32 %s37, %s38
    %p40 = scmp.eq.s32.totalorder %s39, 0
    %s42 = sadd.s32 %s41, 1
    %s43 = scalar_select %p40, %s41, %s42
    %p46 = pneg %p40
    %p47 = scmp.eq.s32.totalorder %s10, 1
    %p48 = por %p46, %p47
    %p49 = scmp.ne.s32.totalorder %s41, %s44
    %p50 = scmp.eq.s32.totalorder %s10, 0
    %p51 = por %p49, %p50
    %p52 = scmp.ne.s32.totalorder %s41, %s44
    %p53 = scmp.eq.s32.totalorder %s15, 1
    %p54 = por %p52, %p53
    %p55 = scmp.ne.s32.totalorder %s44, %s45
    %p56 = scmp.eq.s32.totalorder %s15, 0
    %p57 = por %p55, %p56
    %p58 = scmp.ne.s32.totalorder %s44, %s45
    %p59 = scmp.eq.s32.totalorder %s16, 1
    %p60 = por %p58, %p59
    %p62 = scmp.ne.s32.totalorder %s45, %s61
    %p63 = scmp.eq.s32.totalorder %s16, 0
    %p64 = por %p62, %p63
    %s66 = sadd.s32 %s65, 1
    %p69 = scmp.eq.s32.totalorder %s10, 1
    %p70 = scmp.ne.s32.totalorder %s65, %s67
    %p71 = scmp.eq.s32.totalorder %s10, 0
    %p72 = por %p70, %p71
    %p73 = scmp.ne.s32.totalorder %s65, %s67
    %p74 = scmp.eq.s32.totalorder %s15, 1
    %p75 = por %p73, %p74
    %p76 = scmp.ne.s32.totalorder %s67, %s68
    %p77 = scmp.eq.s32.totalorder %s15, 0
    %p78 = por %p76, %p77
    %p79 = scmp.ne.s32.totalorder %s67, %s68
    %p80 = scmp.eq.s32.totalorder %s16, 1
    %p81 = por %p79, %p80
    %p83 = scmp.ne.s32.totalorder %s68, %s82
    %p84 = scmp.eq.s32.totalorder %s16, 0
    %p85 = por %p83, %p84
    %s87 = sadd.s32 %s86, 1
    %p90 = scmp.eq.s32.totalorder %s10, 1
    %p91 = scmp.ne.s32.totalorder %s86, %s88
    %p92 = scmp.eq.s32.totalorder %s10, 0
    %p93 = por %p91, %p92
    %p94 = scmp.ne.s32.totalorder %s86, %s88
    %p95 = scmp.eq.s32.totalorder %s15, 1
    %p96 = por %p94, %p95
    %p97 = scmp.ne.s32.totalorder %s88, %s89
    %p98 = scmp.eq.s32.totalorder %s15, 0
    %p99 = por %p97, %p98
    %p100 = scmp.ne.s32.totalorder %s88, %s89
    %p101 = scmp.eq.s32.totalorder %s16, 1
    %p102 = por %p100, %p101
    %p104 = scmp.ne.s32.totalorder %s89, %s103
    %p105 = scmp.eq.s32.totalorder %s16, 0
    %p106 = por %p104, %p105
    %s107 = ssub.s32 %s19, %s28
    %p108 = scmp.eq.s32.totalorder %s107, 0
    %s110 = sadd.s32 %s109, 1
    %s111 = scalar_select %p108, %s109, %s110
    %p114 = pneg %p108
    %p115 = scmp.eq.s32.totalorder %s10, 1
    %p116 = por %p114, %p115
    %p117 = scmp.ne.s32.totalorder %s109, %s112
    %p118 = scmp.eq.s32.totalorder %s10, 0
    %p119 = por %p117, %p118
    %p120 = scmp.ne.s32.totalorder %s109, %s112
    %p121 = scmp.eq.s32.totalorder %s15, 1
    %p122 = por %p120, %p121
    %p123 = scmp.ne.s32.totalorder %s112, %s113
    %p124 = scmp.eq.s32.totalorder %s15, 0
    %p125 = por %p123, %p124
    %p126 = scmp.ne.s32.totalorder %s112, %s113
    %p127 = scmp.eq.s32.totalorder %s16, 1
    %p128 = por %p126, %p127
    %p130 = scmp.ne.s32.totalorder %s113, %s129
    %p131 = scmp.eq.s32.totalorder %s16, 0
    %p132 = por %p130, %p131
    %s133 = ssub.s32 %s17, %s36
    %s134 = ssub.s32 %s18, %s32
    %s135 = sor.u32 %s133, %s134
    %s136 = ssub.s32 %s19, %s28
    %s137 = sor.u32 %s135, %s136
    %p138 = scmp.eq.s32.totalorder %s137, 0
    %s140 = sadd.s32 %s139, 1
    %s141 = scalar_select %p138, %s139, %s140
    %p144 = pneg %p138
    %p145 = scmp.eq.s32.totalorder %s10, 1
    %p146 = por %p144, %p145
    %p147 = scmp.ne.s32.totalorder %s139, %s142
    %p148 = scmp.eq.s32.totalorder %s10, 0
    %p149 = por %p147, %p148
    %p150 = scmp.ne.s32.totalorder %s139, %s142
    %p151 = scmp.eq.s32.totalorder %s15, 1
    %p152 = por %p150, %p151
    %p153 = scmp.ne.s32.totalorder %s142, %s143
    %p154 = scmp.eq.s32.totalorder %s15, 0
    %p155 = por %p153, %p154
    %p156 = scmp.ne.s32.totalorder %s142, %s143
    %p157 = scmp.eq.s32.totalorder %s16, 1
    %p158 = por %p156, %p157
    %p160 = scmp.ne.s32.totalorder %s143, %s159
    %p161 = scmp.eq.s32.totalorder %s16, 0
    %p162 = por %p160, %p161
    %p163 = scmp.le.s32.totalorder 1, %s10
    %p164 = scmp.lt.s32.totalorder %s10, 3
    %p165 = pnand %p163, %p164
    %p166 = pneg %p165
    // Predicated region
    $region9: #{transition_forward.1} parent=5 // pred_check
      _
    $region10: #{transition_forward.1} parent=5 // pred_check_branch
      %168 = sbr.rel (%p165) target = $region12
    $region11: #{transition_forward.1} parent=5 // pred_region
      %s169 = ssub.s32 %s10, 1
      // Predicated region
      $region13: #{transition_forward.1} parent=11 // pred_check
        %p170 = pneg %p78
      $region14: #{transition_forward.1} parent=11 // pred_check_branch
        %172 = sbr.rel (%p170) target = $region16
      $region15: #{transition_forward.1} parent=11 // pred_region
        _
      $region16: #{transition_forward.1} parent=11 // pred_fallthru
        _
      // Predicated region
      $region17: #{transition_forward.1} parent=11 // pred_check
        %p173 = pneg %p99
      $region18: #{transition_forward.1} parent=11 // pred_check_branch
        %175 = sbr.rel (%p173) target = $region20
      $region19: #{transition_forward.1} parent=11 // pred_region
        _
      $region20: #{transition_forward.1} parent=11 // pred_fallthru
        _
      // Predicated region
      $region21: #{transition_forward.1} parent=11 // pred_check
        %p176 = pneg %p125
      $region22: #{transition_forward.1} parent=11 // pred_check_branch
        %178 = sbr.rel (%p176) target = $region24
      $region23: #{transition_forward.1} parent=11 // pred_region
        %p179 = scmp.lt.s32.totalorder %s22, 0
        %s180 = scalar_select %p179, %s22, 0
        %s181 = smul.addr %s180, 4
        %s182 = scalar_lea.vmem %s3, %s181
      $region24: #{transition_forward.1} parent=11 // pred_fallthru
        _
    $region12: #{transition_forward.1} parent=5 // pred_fallthru
      _
    %p183 = scmp.lt.s32.totalorder %s10, 2
    // Predicated region
    $region25: #{transition_forward.1} parent=5 // pred_check
      %p184 = pneg %p183
    $region26: #{transition_forward.1} parent=5 // pred_check_branch
      %186 = sbr.rel (%p184) target = $region28
    $region27: #{transition_forward.1} parent=5 // pred_region
      // Predicated region
      $region29: #{transition_forward.1} parent=27 // pred_check
        %p187 = pneg %p51
      $region30: #{transition_forward.1} parent=27 // pred_check_branch
        %189 = sbr.rel (%p187) target = $region32
      $region31: #{transition_forward.1} parent=27 // pred_region
        %s190 = smul.u32 8, %s18
        %p191 = scmp.lt.s32.totalorder %s17, 1
        %s192 = scalar_select %p191, %s17, 1
        %p193 = scmp.lt.s32.totalorder %s190, 7
        %s194 = scalar_select %p193, %s190, 7
        %s195 = smul.addr %s192, 32
        %s196 = sadd.s32 %s194, %s195
        %s197 = smul.addr %s196, 4
        %s198 = scalar_lea.vmem %s0, %s197
        %s199 = smul.u32 8, %s18
      $region32: #{transition_forward.1} parent=27 // pred_fallthru
        _
    $region28: #{transition_forward.1} parent=5 // pred_fallthru
      _
    %p200 = scmp.le.s32.totalorder 1, %s10
    %p201 = scmp.lt.s32.totalorder %s10, 3
    %p202 = pnand %p200, %p201
    %p203 = pneg %p202
    // Predicated region
    $region33: #{transition_forward.1} parent=5 // pred_check
      _
    $region34: #{transition_forward.1} parent=5 // pred_check_branch
      %205 = sbr.rel (%p202) target = $region36
    $region35: #{transition_forward.1} parent=5 // pred_region
      %s206 = ssub.s32 %s10, 1
      %s207 = smul.u32 8, %s21
      %p208 = scmp.lt.s32.totalorder %s20, 1
      %s209 = scalar_select %p208, %s20, 1
      %p210 = scmp.lt.s32.totalorder %s207, 7
      %s211 = scalar_select %p210, %s207, 7
      %s212 = smul.addr %s209, 32
      %s213 = sadd.s32 %s211, %s212
      %s214 = smul.addr %s213, 4
      %s215 = scalar_lea.vmem %s0, %s214
      %p216 = pneg %p57
      %p217 = pneg %p54
      %p218 = pneg %p78
      %p219 = pneg %p75
      %p220 = pneg %p99
      %p221 = pneg %p96
      %p222 = scmp.lt.s32.totalorder %s22, 0
      %s223 = scalar_select %p222, %s22, 0
      %s224 = smul.addr %s223, 4
      %s225 = scalar_lea.vmem %s3, %s224
      %p226 = pneg %p125
      %p227 = pneg %p122
      %p228 = pneg %p155
      %p229 = pneg %p152
      %s230 = smul.u32 8, %s21
      %p231 = scmp.lt.s32.totalorder %s20, 1
      %s232 = scalar_select %p231, %s20, 1
      %p233 = scmp.lt.s32.totalorder %s230, 7
      %s234 = scalar_select %p233, %s230, 7
      %p235 = scmp.lt.s32.totalorder %s22, 0
      %s236 = scalar_select %p235, %s22, 0
      %s237 = sadd.s32 %s236, %s234
      %s238 = smul.addr %s232, 8
      %s239 = sadd.s32 %s237, %s238
      %s240 = smul.addr %s239, 4
      %s241 = scalar_lea.vmem %s4, %s240
      %s242 = smul.u32 8, %s21
      %p243 = scmp.lt.s32.totalorder %s20, 1
      %s244 = scalar_select %p243, %s20, 1
      %p245 = scmp.lt.s32.totalorder %s242, 7
      %s246 = scalar_select %p245, %s242, 7
      %s247 = smul.addr %s244, 32
      %s248 = sadd.s32 %s246, %s247
      %s249 = smul.addr %s248, 4
      %s250 = scalar_lea.vmem %s0, %s249
      %s251 = smul.u32 8, %s21
      %p252 = scmp.lt.s32.totalorder %s22, 0
      %s253 = scalar_select %p252, %s22, 0
      %s254 = smul.addr %s253, 4
      %s255 = scalar_lea.vmem %s3, %s254
      %s256 = smul.u32 8, %s21
      %p257 = scmp.lt.s32.totalorder %s20, 1
      %s258 = scalar_select %p257, %s20, 1
      %p259 = scmp.lt.s32.totalorder %s256, 7
      %s260 = scalar_select %p259, %s256, 7
      %p261 = scmp.lt.s32.totalorder %s22, 0
      %s262 = scalar_select %p261, %s22, 0
      %s263 = sadd.s32 %s262, %s260
      %s264 = smul.addr %s258, 8
      %s265 = sadd.s32 %s263, %s264
      %s266 = smul.addr %s265, 4
      %s267 = scalar_lea.vmem %s4, %s266
      %s268 = smul.u32 8, %s21
      %v269 = vld [vmem:[%s1] sm:$0x1]
      %v270 = vld [vmem:[%s2] sm:$0x1]
      %v271 = vld [vmem:[%s250] sm:$0xf]
      %v272 = vld [vmem:[%s250 + $0x4] sm:$0xf]
      %v273 = vld [vmem:[%s250 + $0x8] sm:$0xf]
      %v274 = vld [vmem:[%s250 + $0xc] sm:$0xf]
      %v275 = vld [vmem:[%s250 + $0x10] sm:$0xf]
      %v276 = vld [vmem:[%s250 + $0x14] sm:$0xf]
      %v277 = vld [vmem:[%s250 + $0x18] sm:$0xf]
      %v278 = vld [vmem:[%s250 + $0x1c] sm:$0xf]
      %v280 = vpack.i.b16 %v269, %v269
      %v282 = vperm.slane %v280, 0
      %v283 = vunpack.c.l.bf16 %v271
      %v284 = vunpack.c.l.bf16 %v272
      %v285 = vunpack.c.l.bf16 %v273
      %v286 = vunpack.c.l.bf16 %v274
      %v287 = vunpack.c.l.bf16 %v275
      %v288 = vunpack.c.l.bf16 %v276
      %v289 = vunpack.c.l.bf16 %v277
      %v290 = vunpack.c.l.bf16 %v278
      %v291 = vunpack.c.l.bf16 %v282
      %v292 = vmul.f32 %v283, %v291
      %v293 = vmul.f32 %v284, %v291
      %v294 = vmul.f32 %v285, %v291
      %v295 = vmul.f32 %v286, %v291
      %v296 = vmul.f32 %v287, %v291
      %v297 = vmul.f32 %v288, %v291
      %v298 = vmul.f32 %v289, %v291
      %v299 = vmul.f32 %v290, %v291
      %v300 = vpack.c.bf16 %v292, %v292
      %v301 = vpack.c.bf16 %v293, %v293
      %v302 = vpack.c.bf16 %v294, %v294
      %v303 = vpack.c.bf16 %v295, %v295
      %v304 = vpack.c.bf16 %v296, %v296
      %v305 = vpack.c.bf16 %v297, %v297
      %v306 = vpack.c.bf16 %v298, %v298
      %v307 = vpack.c.bf16 %v299, %v299
      %v309 = vpack.i.b16 %v270, %v270
      %v311 = vperm.slane %v309, 0
      %v312 = vunpack.c.l.bf16 %v300
      %v313 = vunpack.c.l.bf16 %v301
      %v314 = vunpack.c.l.bf16 %v302
      %v315 = vunpack.c.l.bf16 %v303
      %v316 = vunpack.c.l.bf16 %v304
      %v317 = vunpack.c.l.bf16 %v305
      %v318 = vunpack.c.l.bf16 %v306
      %v319 = vunpack.c.l.bf16 %v307
      %v320 = vunpack.c.l.bf16 %v311
      %v321 = vadd.f32 %v312, %v320
      %v322 = vadd.f32 %v313, %v320
      %v323 = vadd.f32 %v314, %v320
      %v324 = vadd.f32 %v315, %v320
      %v325 = vadd.f32 %v316, %v320
      %v326 = vadd.f32 %v317, %v320
      %v327 = vadd.f32 %v318, %v320
      %v328 = vadd.f32 %v319, %v320
      %v329 = vpack.c.bf16 %v321, %v321
      %v330 = vpack.c.bf16 %v322, %v322
      %v331 = vpack.c.bf16 %v323, %v323
      %v332 = vpack.c.bf16 %v324, %v324
      %v333 = vpack.c.bf16 %v325, %v325
      %v334 = vpack.c.bf16 %v326, %v326
      %v335 = vpack.c.bf16 %v327, %v327
      %v336 = vpack.c.bf16 %v328, %v328
      %v337 = vunpack.c.l.bf16 %v329
      %v338 = vunpack.c.l.bf16 %v330
      %v339 = vunpack.c.l.bf16 %v331
      %v340 = vunpack.c.l.bf16 %v332
      %v341 = vunpack.c.l.bf16 %v333
      %v342 = vunpack.c.l.bf16 %v334
      %v343 = vunpack.c.l.bf16 %v335
      %v344 = vunpack.c.l.bf16 %v336
      %v345 = vmax.f32 %v337, 0.0
      %v346 = vmax.f32 %v338, 0.0
      %v347 = vmax.f32 %v339, 0.0
      %v348 = vmax.f32 %v340, 0.0
      %v349 = vmax.f32 %v341, 0.0
      %v350 = vmax.f32 %v342, 0.0
      %v351 = vmax.f32 %v343, 0.0
      %v352 = vmax.f32 %v344, 0.0
      %v353 = vpack.c.bf16 %v345, %v345
      %v354 = vpack.c.bf16 %v346, %v346
      %v355 = vpack.c.bf16 %v347, %v347
      %v356 = vpack.c.bf16 %v348, %v348
      %v357 = vpack.c.bf16 %v349, %v349
      %v358 = vpack.c.bf16 %v350, %v350
      %v359 = vpack.c.bf16 %v351, %v351
      %v360 = vpack.c.bf16 %v352, %v352
      %s361 = scalar_lea.vmem %s250, 32
      %v362 = vld [vmem:[%s361] sm:$0xf]
      %v363 = vld [vmem:[%s361 + $0x4] sm:$0xf]
      %v364 = vld [vmem:[%s361 + $0x8] sm:$0xf]
      %v365 = vld [vmem:[%s361 + $0xc] sm:$0xf]
      %v366 = vld [vmem:[%s361 + $0x10] sm:$0xf]
      %v367 = vld [vmem:[%s361 + $0x14] sm:$0xf]
      %v368 = vld [vmem:[%s361 + $0x18] sm:$0xf]
      %v369 = vld [vmem:[%s361 + $0x1c] sm:$0xf]
      %v370 = vunpack.c.l.bf16 %v362
      %v371 = vunpack.c.l.bf16 %v363
      %v372 = vunpack.c.l.bf16 %v364
      %v373 = vunpack.c.l.bf16 %v365
      %v374 = vunpack.c.l.bf16 %v366
      %v375 = vunpack.c.l.bf16 %v367
      %v376 = vunpack.c.l.bf16 %v368
      %v377 = vunpack.c.l.bf16 %v369
      %v378 = vmul.f32 %v370, %v291
      %v379 = vmul.f32 %v371, %v291
      %v380 = vmul.f32 %v372, %v291
      %v381 = vmul.f32 %v373, %v291
      %v382 = vmul.f32 %v374, %v291
      %v383 = vmul.f32 %v375, %v291
      %v384 = vmul.f32 %v376, %v291
      %v385 = vmul.f32 %v377, %v291
      %v386 = vpack.c.bf16 %v378, %v378
      %v387 = vpack.c.bf16 %v379, %v379
      %v388 = vpack.c.bf16 %v380, %v380
      %v389 = vpack.c.bf16 %v381, %v381
      %v390 = vpack.c.bf16 %v382, %v382
      %v391 = vpack.c.bf16 %v383, %v383
      %v392 = vpack.c.bf16 %v384, %v384
      %v393 = vpack.c.bf16 %v385, %v385
      %v394 = vunpack.c.l.bf16 %v386
      %v395 = vunpack.c.l.bf16 %v387
      %v396 = vunpack.c.l.bf16 %v388
      %v397 = vunpack.c.l.bf16 %v389
      %v398 = vunpack.c.l.bf16 %v390
      %v399 = vunpack.c.l.bf16 %v391
      %v400 = vunpack.c.l.bf16 %v392
      %v401 = vunpack.c.l.bf16 %v393
      %v402 = vadd.f32 %v394, %v320
      %v403 = vadd.f32 %v395, %v320
      %v404 = vadd.f32 %v396, %v320
      %v405 = vadd.f32 %v397, %v320
      %v406 = vadd.f32 %v398, %v320
      %v407 = vadd.f32 %v399, %v320
      %v408 = vadd.f32 %v400, %v320
      %v409 = vadd.f32 %v401, %v320
      %v410 = vpack.c.bf16 %v402, %v402
      %v411 = vpack.c.bf16 %v403, %v403
      %v412 = vpack.c.bf16 %v404, %v404
      %v413 = vpack.c.bf16 %v405, %v405
      %v414 = vpack.c.bf16 %v406, %v406
      %v415 = vpack.c.bf16 %v407, %v407
      %v416 = vpack.c.bf16 %v408, %v408
      %v417 = vpack.c.bf16 %v409, %v409
      %v418 = vunpack.c.l.bf16 %v410
      %v419 = vunpack.c.l.bf16 %v411
      %v420 = vunpack.c.l.bf16 %v412
      %v421 = vunpack.c.l.bf16 %v413
      %v422 = vunpack.c.l.bf16 %v414
      %v423 = vunpack.c.l.bf16 %v415
      %v424 = vunpack.c.l.bf16 %v416
      %v425 = vunpack.c.l.bf16 %v417
      %v426 = vmax.f32 %v418, 0.0
      %v427 = vmax.f32 %v419, 0.0
      %v428 = vmax.f32 %v420, 0.0
      %v429 = vmax.f32 %v421, 0.0
      %v430 = vmax.f32 %v422, 0.0
      %v431 = vmax.f32 %v423, 0.0
      %v432 = vmax.f32 %v424, 0.0
      %v433 = vmax.f32 %v425, 0.0
      %v434 = vpack.c.bf16 %v426, %v426
      %v435 = vpack.c.bf16 %v427, %v427
      %v436 = vpack.c.bf16 %v428, %v428
      %v437 = vpack.c.bf16 %v429, %v429
      %v438 = vpack.c.bf16 %v430, %v430
      %v439 = vpack.c.bf16 %v431, %v431
      %v440 = vpack.c.bf16 %v432, %v432
      %v441 = vpack.c.bf16 %v433, %v433
      %v442 = vunpack.c.l.bf16 %v353
      %v443 = vunpack.c.l.bf16 %v354
      %v444 = vunpack.c.l.bf16 %v355
      %v445 = vunpack.c.l.bf16 %v356
      %v446 = vunpack.c.l.bf16 %v357
      %v447 = vunpack.c.l.bf16 %v358
      %v448 = vunpack.c.l.bf16 %v359
      %v449 = vunpack.c.l.bf16 %v360
      %v450 = vunpack.c.l.bf16 %v434
      %v451 = vunpack.c.l.bf16 %v435
      %v452 = vunpack.c.l.bf16 %v436
      %v453 = vunpack.c.l.bf16 %v437
      %v454 = vunpack.c.l.bf16 %v438
      %v455 = vunpack.c.l.bf16 %v439
      %v456 = vunpack.c.l.bf16 %v440
      %v457 = vunpack.c.l.bf16 %v441
      %v458 = vadd.f32 %v442, %v450
      %v459 = vadd.f32 %v443, %v451
      %v460 = vadd.f32 %v444, %v452
      %v461 = vadd.f32 %v445, %v453
      %v462 = vadd.f32 %v446, %v454
      %v463 = vadd.f32 %v447, %v455
      %v464 = vadd.f32 %v448, %v456
      %v465 = vadd.f32 %v449, %v457
      %v466 = vpack.c.bf16 %v458, %v458
      %v467 = vpack.c.bf16 %v459, %v459
      %v468 = vpack.c.bf16 %v460, %v460
      %v469 = vpack.c.bf16 %v461, %v461
      %v470 = vpack.c.bf16 %v462, %v462
      %v471 = vpack.c.bf16 %v463, %v463
      %v472 = vpack.c.bf16 %v464, %v464
      %v473 = vpack.c.bf16 %v465, %v465
      %s474 = scalar_lea.vmem %s250, 64
      %v475 = vld [vmem:[%s474] sm:$0xf]
      %v476 = vld [vmem:[%s474 + $0x4] sm:$0xf]
      %v477 = vld [vmem:[%s474 + $0x8] sm:$0xf]
      %v478 = vld [vmem:[%s474 + $0xc] sm:$0xf]
      %v479 = vld [vmem:[%s474 + $0x10] sm:$0xf]
      %v480 = vld [vmem:[%s474 + $0x14] sm:$0xf]
      %v481 = vld [vmem:[%s474 + $0x18] sm:$0xf]
      %v482 = vld [vmem:[%s474 + $0x1c] sm:$0xf]
      %v483 = vunpack.c.l.bf16 %v475
      %v484 = vunpack.c.l.bf16 %v476
      %v485 = vunpack.c.l.bf16 %v477
      %v486 = vunpack.c.l.bf16 %v478
      %v487 = vunpack.c.l.bf16 %v479
      %v488 = vunpack.c.l.bf16 %v480
      %v489 = vunpack.c.l.bf16 %v481
      %v490 = vunpack.c.l.bf16 %v482
      %v491 = vmul.f32 %v483, %v291
      %v492 = vmul.f32 %v484, %v291
      %v493 = vmul.f32 %v485, %v291
      %v494 = vmul.f32 %v486, %v291
      %v495 = vmul.f32 %v487, %v291
      %v496 = vmul.f32 %v488, %v291
      %v497 = vmul.f32 %v489, %v291
      %v498 = vmul.f32 %v490, %v291
      %v499 = vpack.c.bf16 %v491, %v491
      %v500 = vpack.c.bf16 %v492, %v492
      %v501 = vpack.c.bf16 %v493, %v493
      %v502 = vpack.c.bf16 %v494, %v494
      %v503 = vpack.c.bf16 %v495, %v495
      %v504 = vpack.c.bf16 %v496, %v496
      %v505 = vpack.c.bf16 %v497, %v497
      %v506 = vpack.c.bf16 %v498, %v498
      %v507 = vunpack.c.l.bf16 %v499
      %v508 = vunpack.c.l.bf16 %v500
      %v509 = vunpack.c.l.bf16 %v501
      %v510 = vunpack.c.l.bf16 %v502
      %v511 = vunpack.c.l.bf16 %v503
      %v512 = vunpack.c.l.bf16 %v504
      %v513 = vunpack.c.l.bf16 %v505
      %v514 = vunpack.c.l.bf16 %v506
      %v515 = vadd.f32 %v507, %v320
      %v516 = vadd.f32 %v508, %v320
      %v517 = vadd.f32 %v509, %v320
      %v518 = vadd.f32 %v510, %v320
      %v519 = vadd.f32 %v511, %v320
      %v520 = vadd.f32 %v512, %v320
      %v521 = vadd.f32 %v513, %v320
      %v522 = vadd.f32 %v514, %v320
      %v523 = vpack.c.bf16 %v515, %v515
      %v524 = vpack.c.bf16 %v516, %v516
      %v525 = vpack.c.bf16 %v517, %v517
      %v526 = vpack.c.bf16 %v518, %v518
      %v527 = vpack.c.bf16 %v519, %v519
      %v528 = vpack.c.bf16 %v520, %v520
      %v529 = vpack.c.bf16 %v521, %v521
      %v530 = vpack.c.bf16 %v522, %v522
      %v531 = vunpack.c.l.bf16 %v523
      %v532 = vunpack.c.l.bf16 %v524
      %v533 = vunpack.c.l.bf16 %v525
      %v534 = vunpack.c.l.bf16 %v526
      %v535 = vunpack.c.l.bf16 %v527
      %v536 = vunpack.c.l.bf16 %v528
      %v537 = vunpack.c.l.bf16 %v529
      %v538 = vunpack.c.l.bf16 %v530
      %v539 = vmax.f32 %v531, 0.0
      %v540 = vmax.f32 %v532, 0.0
      %v541 = vmax.f32 %v533, 0.0
      %v542 = vmax.f32 %v534, 0.0
      %v543 = vmax.f32 %v535, 0.0
      %v544 = vmax.f32 %v536, 0.0
      %v545 = vmax.f32 %v537, 0.0
      %v546 = vmax.f32 %v538, 0.0
      %v547 = vpack.c.bf16 %v539, %v539
      %v548 = vpack.c.bf16 %v540, %v540
      %v549 = vpack.c.bf16 %v541, %v541
      %v550 = vpack.c.bf16 %v542, %v542
      %v551 = vpack.c.bf16 %v543, %v543
      %v552 = vpack.c.bf16 %v544, %v544
      %v553 = vpack.c.bf16 %v545, %v545
      %v554 = vpack.c.bf16 %v546, %v546
      %v555 = vunpack.c.l.bf16 %v466
      %v556 = vunpack.c.l.bf16 %v467
      %v557 = vunpack.c.l.bf16 %v468
      %v558 = vunpack.c.l.bf16 %v469
      %v559 = vunpack.c.l.bf16 %v470
      %v560 = vunpack.c.l.bf16 %v471
      %v561 = vunpack.c.l.bf16 %v472
      %v562 = vunpack.c.l.bf16 %v473
      %v563 = vunpack.c.l.bf16 %v547
      %v564 = vunpack.c.l.bf16 %v548
      %v565 = vunpack.c.l.bf16 %v549
      %v566 = vunpack.c.l.bf16 %v550
      %v567 = vunpack.c.l.bf16 %v551
      %v568 = vunpack.c.l.bf16 %v552
      %v569 = vunpack.c.l.bf16 %v553
      %v570 = vunpack.c.l.bf16 %v554
      %v571 = vadd.f32 %v555, %v563
      %v572 = vadd.f32 %v556, %v564
      %v573 = vadd.f32 %v557, %v565
      %v574 = vadd.f32 %v558, %v566
      %v575 = vadd.f32 %v559, %v567
      %v576 = vadd.f32 %v560, %v568
      %v577 = vadd.f32 %v561, %v569
      %v578 = vadd.f32 %v562, %v570
      %v579 = vpack.c.bf16 %v571, %v571
      %v580 = vpack.c.bf16 %v572, %v572
      %v581 = vpack.c.bf16 %v573, %v573
      %v582 = vpack.c.bf16 %v574, %v574
      %v583 = vpack.c.bf16 %v575, %v575
      %v584 = vpack.c.bf16 %v576, %v576
      %v585 = vpack.c.bf16 %v577, %v577
      %v586 = vpack.c.bf16 %v578, %v578
      %s587 = scalar_lea.vmem %s250, 96
      %v588 = vld [vmem:[%s587] sm:$0xf]
      %v589 = vld [vmem:[%s587 + $0x4] sm:$0xf]
      %v590 = vld [vmem:[%s587 + $0x8] sm:$0xf]
      %v591 = vld [vmem:[%s587 + $0xc] sm:$0xf]
      %v592 = vld [vmem:[%s587 + $0x10] sm:$0xf]
      %v593 = vld [vmem:[%s587 + $0x14] sm:$0xf]
      %v594 = vld [vmem:[%s587 + $0x18] sm:$0xf]
      %v595 = vld [vmem:[%s587 + $0x1c] sm:$0xf]
      %v596 = vunpack.c.l.bf16 %v588
      %v597 = vunpack.c.l.bf16 %v589
      %v598 = vunpack.c.l.bf16 %v590
      %v599 = vunpack.c.l.bf16 %v591
      %v600 = vunpack.c.l.bf16 %v592
      %v601 = vunpack.c.l.bf16 %v593
      %v602 = vunpack.c.l.bf16 %v594
      %v603 = vunpack.c.l.bf16 %v595
      %v604 = vmul.f32 %v596, %v291
      %v605 = vmul.f32 %v597, %v291
      %v606 = vmul.f32 %v598, %v291
      %v607 = vmul.f32 %v599, %v291
      %v608 = vmul.f32 %v600, %v291
      %v609 = vmul.f32 %v601, %v291
      %v610 = vmul.f32 %v602, %v291
      %v611 = vmul.f32 %v603, %v291
      %v612 = vpack.c.bf16 %v604, %v604
      %v613 = vpack.c.bf16 %v605, %v605
      %v614 = vpack.c.bf16 %v606, %v606
      %v615 = vpack.c.bf16 %v607, %v607
      %v616 = vpack.c.bf16 %v608, %v608
      %v617 = vpack.c.bf16 %v609, %v609
      %v618 = vpack.c.bf16 %v610, %v610
      %v619 = vpack.c.bf16 %v611, %v611
      %v620 = vunpack.c.l.bf16 %v612
      %v621 = vunpack.c.l.bf16 %v613
      %v622 = vunpack.c.l.bf16 %v614
      %v623 = vunpack.c.l.bf16 %v615
      %v624 = vunpack.c.l.bf16 %v616
      %v625 = vunpack.c.l.bf16 %v617
      %v626 = vunpack.c.l.bf16 %v618
      %v627 = vunpack.c.l.bf16 %v619
      %v628 = vadd.f32 %v620, %v320
      %v629 = vadd.f32 %v621, %v320
      %v630 = vadd.f32 %v622, %v320
      %v631 = vadd.f32 %v623, %v320
      %v632 = vadd.f32 %v624, %v320
      %v633 = vadd.f32 %v625, %v320
      %v634 = vadd.f32 %v626, %v320
      %v635 = vadd.f32 %v627, %v320
      %v636 = vpack.c.bf16 %v628, %v628
      %v637 = vpack.c.bf16 %v629, %v629
      %v638 = vpack.c.bf16 %v630, %v630
      %v639 = vpack.c.bf16 %v631, %v631
      %v640 = vpack.c.bf16 %v632, %v632
      %v641 = vpack.c.bf16 %v633, %v633
      %v642 = vpack.c.bf16 %v634, %v634
      %v643 = vpack.c.bf16 %v635, %v635
      %v644 = vunpack.c.l.bf16 %v636
      %v645 = vunpack.c.l.bf16 %v637
      %v646 = vunpack.c.l.bf16 %v638
      %v647 = vunpack.c.l.bf16 %v639
      %v648 = vunpack.c.l.bf16 %v640
      %v649 = vunpack.c.l.bf16 %v641
      %v650 = vunpack.c.l.bf16 %v642
      %v651 = vunpack.c.l.bf16 %v643
      %v652 = vmax.f32 %v644, 0.0
      %v653 = vmax.f32 %v645, 0.0
      %v654 = vmax.f32 %v646, 0.0
      %v655 = vmax.f32 %v647, 0.0
      %v656 = vmax.f32 %v648, 0.0
      %v657 = vmax.f32 %v649, 0.0
      %v658 = vmax.f32 %v650, 0.0
      %v659 = vmax.f32 %v651, 0.0
      %v660 = vpack.c.bf16 %v652, %v652
      %v661 = vpack.c.bf16 %v653, %v653
      %v662 = vpack.c.bf16 %v654, %v654
      %v663 = vpack.c.bf16 %v655, %v655
      %v664 = vpack.c.bf16 %v656, %v656
      %v665 = vpack.c.bf16 %v657, %v657
      %v666 = vpack.c.bf16 %v658, %v658
      %v667 = vpack.c.bf16 %v659, %v659
      %v668 = vunpack.c.l.bf16 %v579
      %v669 = vunpack.c.l.bf16 %v580
      %v670 = vunpack.c.l.bf16 %v581
      %v671 = vunpack.c.l.bf16 %v582
      %v672 = vunpack.c.l.bf16 %v583
      %v673 = vunpack.c.l.bf16 %v584
      %v674 = vunpack.c.l.bf16 %v585
      %v675 = vunpack.c.l.bf16 %v586
      %v676 = vunpack.c.l.bf16 %v660
      %v677 = vunpack.c.l.bf16 %v661
      %v678 = vunpack.c.l.bf16 %v662
      %v679 = vunpack.c.l.bf16 %v663
      %v680 = vunpack.c.l.bf16 %v664
      %v681 = vunpack.c.l.bf16 %v665
      %v682 = vunpack.c.l.bf16 %v666
      %v683 = vunpack.c.l.bf16 %v667
      %v684 = vadd.f32 %v668, %v676
      %v685 = vadd.f32 %v669, %v677
      %v686 = vadd.f32 %v670, %v678
      %v687 = vadd.f32 %v671, %v679
      %v688 = vadd.f32 %v672, %v680
      %v689 = vadd.f32 %v673, %v681
      %v690 = vadd.f32 %v674, %v682
      %v691 = vadd.f32 %v675, %v683
      %v692 = vpack.c.bf16 %v685, %v684
      %v693 = vpack.c.bf16 %v687, %v686
      %v694 = vpack.c.bf16 %v689, %v688
      %v695 = vpack.c.bf16 %v691, %v690
      %v696 = vld [vmem:[%s255] sm:$0xf]
      %v697 = vld [vmem:[%s255 + $0x4] sm:$0xf]
      %v698 = vld [vmem:[%s255 + $0x8] sm:$0xf]
      %v699 = vld [vmem:[%s255 + $0xc] sm:$0xf]
      %v700 = vld [vmem:[%s255 + $0x10] sm:$0xf]
      %v701 = vld [vmem:[%s255 + $0x14] sm:$0xf]
      %v702 = vld [vmem:[%s255 + $0x18] sm:$0xf]
      %v703 = vld [vmem:[%s255 + $0x1c] sm:$0xf]
      %v704 = vld [vmem:[%s255 + $0x20] sm:$0xf]
      %v705 = vld [vmem:[%s255 + $0x24] sm:$0xf]
      %v706 = vld [vmem:[%s255 + $0x28] sm:$0xf]
      %v707 = vld [vmem:[%s255 + $0x2c] sm:$0xf]
      %v708 = vld [vmem:[%s255 + $0x30] sm:$0xf]
      %v709 = vld [vmem:[%s255 + $0x34] sm:$0xf]
      %v710 = vld [vmem:[%s255 + $0x38] sm:$0xf]
      %v711 = vld [vmem:[%s255 + $0x3c] sm:$0xf]
      %v728 = vunpack.c.l.b16 %v696
      %v729 = vunpack.c.l.b16 %v697
      %v730 = vunpack.c.l.b16 %v698
      %v731 = vunpack.c.l.b16 %v699
      %v732 = vunpack.c.l.b16 %v700
      %v733 = vunpack.c.l.b16 %v701
      %v734 = vunpack.c.l.b16 %v702
      %v735 = vunpack.c.l.b16 %v703
      %v736 = vunpack.c.l.b16 %v704
      %v737 = vunpack.c.l.b16 %v705
      %v738 = vunpack.c.l.b16 %v706
      %v739 = vunpack.c.l.b16 %v707
      %v740 = vunpack.c.l.b16 %v708
      %v741 = vunpack.c.l.b16 %v709
      %v742 = vunpack.c.l.b16 %v710
      %v743 = vunpack.c.l.b16 %v711
      %v744 = vpack.c.b16 %v729, %v728
      %v745 = vpack.c.b16 %v731, %v730
      %v746 = vpack.c.b16 %v733, %v732
      %v747 = vpack.c.b16 %v735, %v734
      %v748 = vpack.c.b16 %v737, %v736
      %v749 = vpack.c.b16 %v739, %v738
      %v750 = vpack.c.b16 %v741, %v740
      %v751 = vpack.c.b16 %v743, %v742
      %760 = vmatpush.bf16.msra.mxu0 %v751
      %761 = vmatpush.bf16.msra.mxu0 %v750
      %762 = vmatpush.bf16.msra.mxu0 %v749
      %763 = vmatpush.bf16.msra.mxu0 %v748
      %764 = vmatpush.bf16.msra.mxu0 %v747
      %765 = vmatpush.bf16.msra.mxu0 %v746
      %766 = vmatpush.bf16.msra.mxu0 %v745
      %767 = vmatpush.bf16.msra.mxu0 %v744
      %768 = vmatmul.bf16.gmra.mxu0 %v692
      %v769 = vpop.f32.mrf.mxu0
      %v770 = vadd.f32 0.0, %v769
      %v771 = vpop.f32.mrf.mxu0
      %v772 = vadd.f32 0.0, %v771
      %773 = vmatmul.bf16.gmra.mxu0 %v693
      %v774 = vpop.f32.mrf.mxu0
      %v775 = vadd.f32 0.0, %v774
      %v776 = vpop.f32.mrf.mxu0
      %v777 = vadd.f32 0.0, %v776
      %778 = vmatmul.bf16.gmra.mxu0 %v694
      %v779 = vpop.f32.mrf.mxu0
      %v780 = vadd.f32 0.0, %v779
      %v781 = vpop.f32.mrf.mxu0
      %v782 = vadd.f32 0.0, %v781
      %783 = vmatmul.bf16.gmra.mxu0 %v695
      %v784 = vpop.f32.mrf.mxu0
      %v785 = vadd.f32 0.0, %v784
      %v786 = vpop.f32.mrf.mxu0
      %v787 = vadd.f32 0.0, %v786
      %788 = vdwg.mxu0
      %v789 = vpack.c.bf16 %v770, %v770
      %v790 = vpack.c.bf16 %v772, %v772
      %v791 = vpack.c.bf16 %v775, %v775
      %v792 = vpack.c.bf16 %v777, %v777
      %v793 = vpack.c.bf16 %v780, %v780
      %v794 = vpack.c.bf16 %v782, %v782
      %v795 = vpack.c.bf16 %v785, %v785
      %v796 = vpack.c.bf16 %v787, %v787
      %797 = vst [vmem:[%s267] sm:$0xf] %v789
      %798 = vst [vmem:[%s267 + $0x4] sm:$0xf] %v790
      %799 = vst [vmem:[%s267 + $0x8] sm:$0xf] %v791
      %800 = vst [vmem:[%s267 + $0xc] sm:$0xf] %v792
      %801 = vst [vmem:[%s267 + $0x10] sm:$0xf] %v793
      %802 = vst [vmem:[%s267 + $0x14] sm:$0xf] %v794
      %803 = vst [vmem:[%s267 + $0x18] sm:$0xf] %v795
      %804 = vst [vmem:[%s267 + $0x1c] sm:$0xf] %v796
      %s805 = smul.u32 8, %s21
      %p806 = scmp.lt.s32.totalorder %s20, 1
      %s807 = scalar_select %p806, %s20, 1
      %p808 = scmp.lt.s32.totalorder %s805, 7
      %s809 = scalar_select %p808, %s805, 7
      %p810 = scmp.lt.s32.totalorder %s22, 0
      %s811 = scalar_select %p810, %s22, 0
      %s812 = sadd.s32 %s811, %s809
      %s813 = smul.addr %s807, 8
      %s814 = sadd.s32 %s812, %s813
      %s815 = smul.addr %s814, 4
      %s816 = scalar_lea.vmem %s4, %s815
      // Predicated region
      $region37: #{transition_forward.1} parent=35 // pred_check
        %p817 = pneg %p152
      $region38: #{transition_forward.1} parent=35 // pred_check_branch
        %819 = sbr.rel (%p817) target = $region40
      $region39: #{transition_forward.1} parent=35 // pred_region
        %s820 = smul.u32 8, %s21
      $region40: #{transition_forward.1} parent=35 // pred_fallthru
        _
    $region36: #{transition_forward.1} parent=5 // pred_fallthru
      _
    %p821 = scmp.le.s32.totalorder 2, %s10
    // Predicated region
    $region41: #{transition_forward.1} parent=5 // pred_check
      %p822 = pneg %p821
    $region42: #{transition_forward.1} parent=5 // pred_check_branch
      %824 = sbr.rel (%p822) target = $region44
    $region43: #{transition_forward.1} parent=5 // pred_region
      %s825 = ssub.s32 %s10, 2
      // Predicated region
      $region45: #{transition_forward.1} parent=43 // pred_check
        %p826 = pneg %p158
      $region46: #{transition_forward.1} parent=43 // pred_check_branch
        %828 = sbr.rel (%p826) target = $region48
      $region47: #{transition_forward.1} parent=43 // pred_region
        %s829 = smul.u32 8, %s24
        %p830 = scmp.lt.s32.totalorder %s23, 1
        %s831 = scalar_select %p830, %s23, 1
        %p832 = scmp.lt.s32.totalorder %s829, 7
        %s833 = scalar_select %p832, %s829, 7
        %p834 = scmp.lt.s32.totalorder %s25, 0
        %s835 = scalar_select %p834, %s25, 0
        %s836 = sadd.s32 %s835, %s833
        %s837 = smul.addr %s831, 8
        %s838 = sadd.s32 %s836, %s837
        %s839 = smul.addr %s838, 4
        %s840 = scalar_lea.vmem %s4, %s839
      $region48: #{transition_forward.1} parent=43 // pred_fallthru
        _
    $region44: #{transition_forward.1} parent=5 // pred_fallthru
      _
  $region6: #{transition_forward.1} parent=0 // loop_footer
    %s14 = sadd.s32 1, %s10
  $region7: #{transition_forward.1} parent=0 // loop_footer_branch
    %9 = sbr.rel target = $region3
  $region8: #{transition_forward.1} parent=0 // loop_exit
    _

</llo_original>
